<compile_context>
chip_gen: v6e
topology: v6e:2x2x1
jax: 0.10.0
libtpu: 0.0.40
codegen_flags: <defaults>
</compile_context>

<pallas_src>
import functools
from typing import NamedTuple

import jax
import jax.numpy as jnp
from jax.experimental import pallas as pl
from jax.experimental.pallas import tpu as pltpu

_LANE = 128


def _round_up(x, m):
    return (x + m - 1) // m * m


def _cdiv(a, b):
    return -(-a // b)


# --------------------------------------------------------------------------
# One-time hardware / capability queries (cached, never per forward call)
# --------------------------------------------------------------------------
@functools.lru_cache(maxsize=None)
def _tpu_config():
    try:
        kind = jax.devices()[0].device_kind.lower()
    except Exception:
        kind = ""
    is_v7x = ("v7" in kind)
    is_v5e = ("v5 lite" in kind) or ("v5e" in kind) or ("v5litepod" in kind)
    try:
        vmem_cap = int(pltpu.get_tpu_info().vmem_capacity_bytes)
    except Exception:
        vmem_cap = (64 if is_v7x else 128) * 1024 * 1024
    # Leave ~25% headroom for double-buffered x/out tiles, the f32 activation
    # tile and Mosaic internal scratch; cap so huge reports stay sane.
    vmem_limit = min(int(vmem_cap * 3 // 4), 100 * 1024 * 1024)
    num_tc = 2 if is_v7x else 1   # v7x has 2 TensorCores per chip
    return {"kind": kind, "is_v7x": is_v7x, "is_v5e": is_v5e,
            "vmem_cap": vmem_cap, "vmem_limit": vmem_limit, "num_tc": num_tc}


@functools.lru_cache(maxsize=None)
def _single_buffer_supported():
    """Probe once whether this JAX build accepts pl.Buffered(1) on a BlockSpec."""
    def _k(x_ref, w_ref, o_ref):
        o_ref[...] = x_ref[...] + w_ref[...]
    try:
        f = pl.pallas_call(
            _k,
            out_shape=jax.ShapeDtypeStruct((8, 128), jnp.float32),
            grid_spec=pltpu.PrefetchScalarGridSpec(
                num_scalar_prefetch=0, grid=(1,),
                in_specs=[pl.BlockSpec((8, 128), lambda i: (0, 0)),
                          pl.BlockSpec((8, 128), lambda i: (0, 0),
                                       pipeline_mode=pl.Buffered(1))],
                out_specs=pl.BlockSpec((8, 128), lambda i: (0, 0))))
        jax.block_until_ready(f(jnp.zeros((8, 128), jnp.float32),
                                jnp.ones((8, 128), jnp.float32)))
        return True
    except Exception:
        return False


# --------------------------------------------------------------------------
# Kernels
# --------------------------------------------------------------------------
def _mlp_kernel_resident(x_ref, win_ref, bin_ref, wh_ref, bh_ref, wout_ref,
                         bout_ref, o_ref, *, num_hidden_layers):
    """All weights resident in VMEM (fits the per-generation VMEM budget)."""
    cdt = win_ref.dtype
    h = jnp.dot(x_ref[...], win_ref[...], preferred_element_type=jnp.float32)
    h = jnp.maximum(h + bin_ref[...], 0.0)
    # num_hidden_layers is small and static -> keep the python unroll.
    for l in range(num_hidden_layers):
        h = jnp.dot(h.astype(cdt), wh_ref[l], preferred_element_type=jnp.float32)
        h = jnp.maximum(h + bh_ref[l], 0.0)
    out = jnp.dot(h.astype(cdt), wout_ref[...], preferred_element_type=jnp.float32)
    o_ref[...] = (out + bout_ref[...]).astype(o_ref.dtype)


def _mlp_kernel_stream(x_ref, win_ref, bin_ref, wh_hbm, bh_ref, wout_ref,
                       bout_ref, o_ref, wh_buf, wh_sem, *, num_hidden_layers):
    """Hidden weights stay in HBM; one (H,H) layer slab is streamed at a time
    with a 2-deep double buffer, so the next layer's DMA hides behind the
    current layer's matmul (needed for production H/L on v7x's 64 MiB VMEM)."""
    cdt = win_ref.dtype
    L = num_hidden_layers

    copies = []
    if L > 0:
        cp = pltpu.make_async_copy(wh_hbm.at[0], wh_buf.at[0], wh_sem.at[0])
        cp.start()
        copies.append(cp)

    h = jnp.dot(x_ref[...], win_ref[...], preferred_element_type=jnp.float32)
    h = jnp.maximum(h + bin_ref[...], 0.0)

    for l in range(L):
        slot = l & 1
        if l + 1 < L:
            nxt = pltpu.make_async_copy(wh_hbm.at[l + 1], wh_buf.at[1 - slot],
                                        wh_sem.at[1 - slot])
            nxt.start()
            copies.append(nxt)
        copies[l].wait()
        h = jnp.dot(h.astype(cdt), wh_buf[slot],
                    preferred_element_type=jnp.float32)
        h = jnp.maximum(h + bh_ref[l], 0.0)

    out = jnp.dot(h.astype(cdt), wout_ref[...], preferred_element_type=jnp.float32)
    o_ref[...] = (out + bout_ref[...]).astype(o_ref.dtype)


# --------------------------------------------------------------------------
# Cached pallas_call builder (one per static shape configuration)
# --------------------------------------------------------------------------
@functools.lru_cache(maxsize=None)
def _build_forward_call(L, in_p, h_p, out_p, tile_b, n_steps,
                        compute_dtype_name, out_dtype_name,
                        stream_wh, single_buffer_weights, vmem_limit):
    compute_dtype = jnp.dtype(compute_dtype_name)
    out_dtype = jnp.dtype(out_dtype_name)
    b_pad = tile_b * n_steps
    Ls = max(L, 1)

    # Grid-invariant weights/biases: single-buffer them if the build supports
    # it (double-buffering constant blocks is pure VMEM waste).
    wkw = dict(pipeline_mode=pl.Buffered(1)) if single_buffer_weights else {}

    in_specs = [
        pl.BlockSpec((tile_b, in_p), lambda i: (i, 0)),            # x tile
        pl.BlockSpec((in_p, h_p), lambda i: (0, 0), **wkw),        # W_in
        pl.BlockSpec((1, h_p), lambda i: (0, 0), **wkw),           # b_in
    ]
    if stream_wh:
        in_specs.append(pl.BlockSpec(memory_space=pl.ANY))         # W_hidden (HBM)
        scratch_shapes = [pltpu.VMEM((2, h_p, h_p), compute_dtype),
                          pltpu.SemaphoreType.DMA((2,))]
        kernel = functools.partial(_mlp_kernel_stream, num_hidden_layers=L)
    else:
        in_specs.append(pl.BlockSpec((Ls, h_p, h_p),
                                     lambda i: (0, 0, 0), **wkw))  # W_hidden
        scratch_shapes = []
        kernel = functools.partial(_mlp_kernel_resident, num_hidden_layers=L)
    in_specs += [
        pl.BlockSpec((Ls, 1, h_p), lambda i: (0, 0, 0), **wkw),    # b_hidden
        pl.BlockSpec((h_p, out_p), lambda i: (0, 0), **wkw),       # W_out
        pl.BlockSpec((1, out_p), lambda i: (0, 0), **wkw),         # b_out
    ]
    out_specs = pl.BlockSpec((tile_b, out_p), lambda i: (i, 0))

    # Advisory cost estimate so XLA schedules surrounding ops sensibly.
    w_item = compute_dtype.itemsize
    flops = 2 * b_pad * (in_p * h_p + L * h_p * h_p + h_p * out_p)
    weight_bytes = ((in_p * h_p + Ls * h_p * h_p + h_p * out_p) * w_item
                    + ((Ls + 1) * h_p + out_p) * 4)
    if stream_wh:
        weight_bytes += (n_steps - 1) * Ls * h_p * h_p * w_item  # re-streamed/tile
    io_bytes = b_pad * (in_p * w_item + out_p * out_dtype.itemsize)
    cost = pl.CostEstimate(flops=flops, transcendentals=0,
                           bytes_accessed=weight_bytes + io_bytes)

    return pl.pallas_call(
        kernel,
        out_shape=jax.ShapeDtypeStruct((b_pad, out_p), out_dtype),
        grid_spec=pltpu.PrefetchScalarGridSpec(
            num_scalar_prefetch=0,
            grid=(n_steps,),
            in_specs=in_specs,
            out_specs=out_specs,
            scratch_shapes=scratch_shapes),
        compiler_params=pltpu.CompilerParams(
            # "parallel" on the batch axis shards grid steps across v7x's two
            # TensorCores; on 1-TC chips (v5e/v6e) it is a no-op.
            dimension_semantics=("parallel",),
            vmem_limit_bytes=int(vmem_limit)),
        cost_estimate=cost,
    )


# --------------------------------------------------------------------------
# Parameter preparation (pad + cast ONCE) and the jittable forward
# --------------------------------------------------------------------------
class DynamicsMeta(NamedTuple):
    in_dim: int
    out_dim: int
    num_hidden_layers: int
    in_p: int
    h_p: int
    out_p: int
    compute_dtype: str
    single_buffer_weights: bool
    stream_wh: bool
    vmem_limit: int
    num_tc: int
    is_v5e: bool
    is_v7x: bool


def prepare_params(params, compute_dtype=jnp.bfloat16, force_stream_wh=None):
    """Pad all feature dims to lane width 128 and cast weights to the compute
    dtype ONCE. Returns (weights_dict, meta). Zero padding is exact through
    matmul/bias/ReLU, so results match the unpadded network after slicing."""
    win, bin_, wh, bh, wout, bout = (params["win"], params["bin"], params["wh"],
                                     params["bh"], params["wout"], params["bout"])
    in_dim, H = int(win.shape[0]), int(win.shape[1])
    L = int(wh.shape[0])
    out_dim = int(wout.shape[1])
    compute_dtype = jnp.dtype(compute_dtype)

    in_p = _round_up(in_dim, _LANE)
    h_p = _round_up(H, _LANE)
    out_p = _round_up(out_dim, _LANE)

    def pad2(a, r, c, dt):
        a = a.astype(dt)
        return jnp.pad(a, ((0, r - a.shape[0]), (0, c - a.shape[1])))

    win_p = pad2(win, in_p, h_p, compute_dtype)
    wout_p = pad2(wout, h_p, out_p, compute_dtype)
    bin_p = pad2(bin_.reshape(1, H), 1, h_p, jnp.float32)
    bout_p = pad2(bout.reshape(1, out_dim), 1, out_p, jnp.float32)
    if L > 0:
        wh_p = jnp.pad(wh.astype(compute_dtype),
                       ((0, 0), (0, h_p - H), (0, h_p - H)))
        bh_p = jnp.pad(bh.reshape(L, 1, H).astype(jnp.float32),
                       ((0, 0), (0, 0), (0, h_p - H)))
    else:  # dummy single slab so BlockSpec shapes stay non-empty (never used)
        wh_p = jnp.zeros((1, h_p, h_p), compute_dtype)
        bh_p = jnp.zeros((1, 1, h_p), jnp.float32)

    cfg = _tpu_config()
    single_buf = _single_buffer_supported()
    wbuf = 1 if single_buf else 2
    Ls = max(L, 1)
    itemsize = compute_dtype.itemsize
    resident_bytes = wbuf * ((in_p * h_p + Ls * h_p * h_p + h_p * out_p) * itemsize
                             + ((Ls + 1) * h_p + out_p) * 4)
    reserve = 16 * 1024 * 1024  # x/out tiles (double-buffered) + f32 activations
    if force_stream_wh is None:
        stream_wh = (L >= 1) and (resident_bytes + reserve > cfg["vmem_limit"])
    else:
        stream_wh = bool(force_stream_wh) and (L >= 1)

    weights = {"win": win_p, "bin": bin_p, "wh": wh_p, "bh": bh_p,
               "wout": wout_p, "bout": bout_p}
    meta = DynamicsMeta(in_dim, out_dim, L, in_p, h_p, out_p,
                        compute_dtype.name, bool(single_buf), bool(stream_wh),
                        int(cfg["vmem_limit"]), int(cfg["num_tc"]),
                        bool(cfg["is_v5e"]), bool(cfg["is_v7x"]))
    return weights, meta


def _batch_tiling(B, pack, meta, user_tile_b):
    """Pick (b_pad, tile_b, n_steps). Keeps the last tile nearly full instead of
    rounding the batch up to a whole max-sized tile."""
    b_min = _round_up(max(int(B), 1), pack)
    if user_tile_b is not None:
        tile_b = _round_up(int(user_tile_b), pack)
    else:
        if meta.is_v5e:
            max_tile = 256          # 128-deep MXU, tighter f32 activation budget
        else:
            max_tile = 512 if b_min >= 1024 else 256   # v6e/v7x: longer MXU bursts
        n = _cdiv(b_min, max_tile)
        if meta.num_tc > 1 and b_min > 128:
            n = max(n, meta.num_tc)  # keep >=2 steps so both v7x TCs get work
        tile_b = _round_up(_cdiv(b_min, n), pack)
    n_steps = _cdiv(b_min, tile_b)
    return tile_b * n_steps, tile_b, n_steps


def dynamics_network_forward(x, weights, meta, *, tile_b=None):
    """Pallas forward for the dynamics MLP: x = concat(s, a, alpha) -> s'.
    `weights`/`meta` come from prepare_params; jittable (meta is static)."""
    B, in_dim = x.shape
    assert in_dim == meta.in_dim, "input feature dim mismatch"
    compute_dtype = jnp.dtype(meta.compute_dtype)
    out_dtype = jnp.dtype(x.dtype)

    # Sublane packing of the compute dtype (bf16 packs 2 rows/sublane).
    pack = {1: 32, 2: 16}.get(compute_dtype.itemsize, 8)
    b_pad, tb, n_steps = _batch_tiling(B, pack, meta, tile_b)

    x_p = jnp.pad(x.astype(compute_dtype),
                  ((0, b_pad - B), (0, meta.in_p - in_dim)))

    call = _build_forward_call(meta.num_hidden_layers, meta.in_p, meta.h_p,
                               meta.out_p, tb, n_steps,
                               compute_dtype.name, out_dtype.name,
                               meta.stream_wh, meta.single_buffer_weights,
                               meta.vmem_limit)
    out_padded = call(x_p, weights["win"], weights["bin"], weights["wh"],
                      weights["bh"], weights["wout"], weights["bout"])
    return out_padded[:B, :meta.out_dim]


# --------------------------------------------------------------------------
# Synthetic init + pure-JAX reference
# --------------------------------------------------------------------------
def init_params(key, state_dim, action_dim, param_dim, hidden_dim,
                num_hidden_layers, dtype=jnp.float32):
    """Deterministic synthetic parameter init (PyTorch Linear-like uniform)."""
    in_dim = state_dim + action_dim + param_dim
    keys = jax.random.split(key, 6)

    def linear_init(k, fan_in, fan_out):
        kw, kb = jax.random.split(k)
        bound = 1.0 / jnp.sqrt(fan_in)
        w = jax.random.uniform(kw, (fan_in, fan_out), dtype, -bound, bound)
        b = jax.random.uniform(kb, (fan_out,), dtype, -bound, bound)
        return w, b

    win, bin_ = linear_init(keys[0], in_dim, hidden_dim)
    wh_list, bh_list = [], []
    hkeys = jax.random.split(keys[1], num_hidden_layers)
    for l in range(num_hidden_layers):
        w, b = linear_init(hkeys[l], hidden_dim, hidden_dim)
        wh_list.append(w)
        bh_list.append(b)
    wout, bout = linear_init(keys[2], hidden_dim, state_dim)

    return {"win": win, "bin": bin_,
            "wh": jnp.stack(wh_list, axis=0), "bh": jnp.stack(bh_list, axis=0),
            "wout": wout, "bout": bout}


def reference_forward(x, params, compute_dtype=jnp.float32):
    """Pure-JAX reference mirroring the kernel's dtype path (f32 accumulation)."""
    cdt = compute_dtype
    h = jnp.dot(x.astype(cdt), params["win"].astype(cdt),
                preferred_element_type=jnp.float32)
    h = jnp.maximum(h + params["bin"].astype(jnp.float32), 0.0)
    for l in range(params["wh"].shape[0]):
        h = jnp.dot(h.astype(cdt), params["wh"][l].astype(cdt),
                    preferred_element_type=jnp.float32)
        h = jnp.maximum(h + params["bh"][l].astype(jnp.float32), 0.0)
    out = jnp.dot(h.astype(cdt), params["wout"].astype(cdt),
                  preferred_element_type=jnp.float32)
    return out + params["bout"].astype(jnp.float32)


if __name__ == "__main__":
    # Small, module-consistent shapes: flat state, continuous action, embedding.
    state_dim, action_dim, param_dim = 8, 4, 4   # alpha = dynamics embedding
    hidden_dim, num_hidden_layers = 32, 4
    batch = 8
    in_dim = state_dim + action_dim + param_dim  # = 16

    key = jax.random.PRNGKey(0)
    kx, kp = jax.random.split(key)
    params = init_params(kp, state_dim, action_dim, param_dim,
                         hidden_dim, num_hidden_layers)
    # x = concat([state, action, alpha], axis=-1), shape (batch, 16)
    x = jax.random.normal(kx, (batch, in_dim), jnp.float32)

    ref_bf16 = reference_forward(x, params, compute_dtype=jnp.bfloat16)
    ref_f32 = reference_forward(x, params, compute_dtype=jnp.float32)

    # ---- bf16 fast path: pad/cast once, jit the forward (meta is static) ----
    weights, meta = prepare_params(params, compute_dtype=jnp.bfloat16)
    fwd = jax.jit(dynamics_network_forward, static_argnums=(2,))
    out = jax.block_until_ready(fwd(x, weights, meta))
    assert out.shape == (batch, state_dim)
    assert jnp.allclose(out, ref_bf16, atol=2e-3, rtol=2e-3), \
        "mismatch vs bf16-path reference"
    assert jnp.allclose(out, ref_f32, atol=5e-2, rtol=5e-2), \
        "mismatch vs f32 reference (beyond bf16 rounding)"

    # ---- forced layer-streaming path (exercises the manual DMA double buffer
    #      used for production-sized H/L on v7x) ----
    weights_s, meta_s = prepare_params(params, compute_dtype=jnp.bfloat16,
                                       force_stream_wh=True)
    out_s = jax.block_until_ready(fwd(x, weights_s, meta_s))
    assert jnp.allclose(out_s, ref_bf16, atol=2e-3, rtol=2e-3), \
        "streaming-weights path mismatch vs bf16 reference"

    # ---- pure-f32 path sanity check (slow MXU mode; correctness only) ----
    weights32, meta32 = prepare_params(params, compute_dtype=jnp.float32)
    out_f32 = jax.block_until_ready(fwd(x, weights32, meta32))
    assert jnp.allclose(out_f32, ref_f32, atol=1e-4, rtol=1e-4), \
        "f32 path mismatch vs reference"

    print("KERNEL_OK")
</pallas_src>

<mosaic_0001>
module attributes {stable_mosaic.version = 11 : i64} {
  func.func @_k(%arg0: i32, %arg1: memref<8x128xf32, #tpu.memory_space<vmem>>, %arg2: memref<8x128xf32, #tpu.memory_space<vmem>>, %arg3: memref<8x128xf32, #tpu.memory_space<vmem>>) attributes {dimension_semantics = [#tpu.dimension_semantics<arbitrary>], iteration_bounds = array<i64: 1>, scalar_prefetch = 0 : i64, scratch_operands = 0 : i64, tpu.core_type = #tpu.core_type<tc>, window_params = [{pipeline_mode = #tpu.pipeline_mode<synchronous>, transform_indices = @transform_0, window_bounds = array<i64: 8, 128>}, {pipeline_mode = #tpu.pipeline_mode<synchronous>, transform_indices = @transform_1, window_bounds = array<i64: 8, 128>}, {pipeline_mode = #tpu.pipeline_mode<synchronous>, transform_indices = @transform_2, window_bounds = array<i64: 8, 128>}]} {
    %c0 = arith.constant 0 : index
    %c0_0 = arith.constant 0 : index
    %0 = vector.load %arg1[%c0, %c0_0] : memref<8x128xf32, #tpu.memory_space<vmem>>, vector<8x128xf32>
    %c0_1 = arith.constant 0 : index
    %c0_2 = arith.constant 0 : index
    %1 = vector.load %arg2[%c0_1, %c0_2] : memref<8x128xf32, #tpu.memory_space<vmem>>, vector<8x128xf32>
    %2 = arith.addf %0, %1 : vector<8x128xf32>
    %c0_3 = arith.constant 0 : index
    %c0_4 = arith.constant 0 : index
    %3 = vector.load %arg3[%c0_3, %c0_4] : memref<8x128xf32, #tpu.memory_space<vmem>>, vector<8x128xf32>
    tpu.vector_store %arg3[%c0_3, %c0_4], %2 {strides = array<i32>} : memref<8x128xf32, #tpu.memory_space<vmem>>, vector<8x128xf32>,
    return
  }
  func.func @transform_0(%arg0: i32) -> (i32, i32) {
    %c0_i32 = arith.constant 0 : i32
    %c0_i32_0 = arith.constant 0 : i32
    %c0_i32_1 = arith.constant 0 : i32
    return %c0_i32, %c0_i32_0 : i32, i32
  }
  func.func @transform_1(%arg0: i32) -> (i32, i32) {
    %c0_i32 = arith.constant 0 : i32
    %c0_i32_0 = arith.constant 0 : i32
    %c0_i32_1 = arith.constant 0 : i32
    return %c0_i32, %c0_i32_0 : i32, i32
  }
  func.func @transform_2(%arg0: i32) -> (i32, i32) {
    %c0_i32 = arith.constant 0 : i32
    %c0_i32_0 = arith.constant 0 : i32
    %c0_i32_1 = arith.constant 0 : i32
    return %c0_i32, %c0_i32_0 : i32, i32
  }
}

module attributes {stable_mosaic.version = 11 : i64} {
  func.func @_mlp_kernel_resident(%arg0: i32, %arg1: memref<16x128xbf16, #tpu.memory_space<vmem>>, %arg2: memref<128x128xbf16, #tpu.memory_space<vmem>>, %arg3: memref<1x128xf32, #tpu.memory_space<vmem>>, %arg4: memref<4x128x128xbf16, #tpu.memory_space<vmem>>, %arg5: memref<4x1x128xf32, #tpu.memory_space<vmem>>, %arg6: memref<128x128xbf16, #tpu.memory_space<vmem>>, %arg7: memref<1x128xf32, #tpu.memory_space<vmem>>, %arg8: memref<16x128xf32, #tpu.memory_space<vmem>>) attributes {dimension_semantics = [#tpu.dimension_semantics<parallel>], iteration_bounds = array<i64: 1>, scalar_prefetch = 0 : i64, scratch_operands = 0 : i64, tpu.core_type = #tpu.core_type<tc>, window_params = [{transform_indices = @transform_0, window_bounds = array<i64: 16, 128>}, {pipeline_mode = #tpu.pipeline_mode<synchronous>, transform_indices = @transform_1, window_bounds = array<i64: 128, 128>}, {pipeline_mode = #tpu.pipeline_mode<synchronous>, transform_indices = @transform_2, window_bounds = array<i64: 1, 128>}, {pipeline_mode = #tpu.pipeline_mode<synchronous>, transform_indices = @transform_3, window_bounds = array<i64: 4, 128, 128>}, {pipeline_mode = #tpu.pipeline_mode<synchronous>, transform_indices = @transform_4, window_bounds = array<i64: 4, 1, 128>}, {pipeline_mode = #tpu.pipeline_mode<synchronous>, transform_indices = @transform_5, window_bounds = array<i64: 128, 128>}, {pipeline_mode = #tpu.pipeline_mode<synchronous>, transform_indices = @transform_6, window_bounds = array<i64: 1, 128>}, {transform_indices = @transform_7, window_bounds = array<i64: 16, 128>}]} {
    %c0 = arith.constant 0 : index
    %c0_0 = arith.constant 0 : index
    %0 = vector.load %arg1[%c0, %c0_0] : memref<16x128xbf16, #tpu.memory_space<vmem>>, vector<16x128xbf16>
    %c0_1 = arith.constant 0 : index
    %c0_2 = arith.constant 0 : index
    %1 = vector.load %arg2[%c0_1, %c0_2] : memref<128x128xbf16, #tpu.memory_space<vmem>>, vector<128x128xbf16>
    %cst = arith.constant dense<0.000000e+00> : vector<16x128xf32>
    %2 = tpu.matmul %0, %1, %cst {dimension_numbers = #tpu.dot_dimension_numbers<[1], [0], [0], [1], [0, 0, 1, 1], [], []>} : vector<16x128xbf16>, vector<128x128xbf16>, vector<16x128xf32> -> vector<16x128xf32>
    %c0_3 = arith.constant 0 : index
    %c0_4 = arith.constant 0 : index
    %3 = vector.load %arg3[%c0_3, %c0_4] : memref<1x128xf32, #tpu.memory_space<vmem>>, vector<1x128xf32>
    %4 = vector.broadcast %3 : vector<1x128xf32> to vector<16x128xf32>
    %5 = arith.addf %2, %4 : vector<16x128xf32>
    %cst_5 = arith.constant 0.000000e+00 : f32
    %6 = vector.broadcast %cst_5 : f32 to vector<16x128xf32>
    %7 = arith.maximumf %5, %6 : vector<16x128xf32>
    %8 = arith.truncf %7 : vector<16x128xf32> to vector<16x128xbf16>
    %c0_6 = arith.constant 0 : index
    %c0_7 = arith.constant 0 : index
    %c0_8 = arith.constant 0 : index
    %9 = vector.load %arg4[%c0_6, %c0_7, %c0_8] : memref<4x128x128xbf16, #tpu.memory_space<vmem>>, vector<1x128x128xbf16>
    %10 = vector.shape_cast %9 : vector<1x128x128xbf16> to vector<128x128xbf16>
    %cst_9 = arith.constant dense<0.000000e+00> : vector<16x128xf32>
    %11 = tpu.matmul %8, %10, %cst_9 {dimension_numbers = #tpu.dot_dimension_numbers<[1], [0], [0], [1], [0, 0, 1, 1], [], []>} : vector<16x128xbf16>, vector<128x128xbf16>, vector<16x128xf32> -> vector<16x128xf32>
    %c0_10 = arith.constant 0 : index
    %c0_11 = arith.constant 0 : index
    %c0_12 = arith.constant 0 : index
    %12 = vector.load %arg5[%c0_10, %c0_11, %c0_12] : memref<4x1x128xf32, #tpu.memory_space<vmem>>, vector<1x1x128xf32>
    %13 = vector.shape_cast %12 : vector<1x1x128xf32> to vector<1x128xf32>
    %14 = vector.broadcast %13 : vector<1x128xf32> to vector<16x128xf32>
    %15 = arith.addf %11, %14 : vector<16x128xf32>
    %cst_13 = arith.constant 0.000000e+00 : f32
    %16 = vector.broadcast %cst_13 : f32 to vector<16x128xf32>
    %17 = arith.maximumf %15, %16 : vector<16x128xf32>
    %18 = arith.truncf %17 : vector<16x128xf32> to vector<16x128xbf16>
    %c1 = arith.constant 1 : index
    %c0_14 = arith.constant 0 : index
    %c0_15 = arith.constant 0 : index
    %19 = vector.load %arg4[%c1, %c0_14, %c0_15] : memref<4x128x128xbf16, #tpu.memory_space<vmem>>, vector<1x128x128xbf16>
    %20 = vector.shape_cast %19 : vector<1x128x128xbf16> to vector<128x128xbf16>
    %cst_16 = arith.constant dense<0.000000e+00> : vector<16x128xf32>
    %21 = tpu.matmul %18, %20, %cst_16 {dimension_numbers = #tpu.dot_dimension_numbers<[1], [0], [0], [1], [0, 0, 1, 1], [], []>} : vector<16x128xbf16>, vector<128x128xbf16>, vector<16x128xf32> -> vector<16x128xf32>
    %c1_17 = arith.constant 1 : index
    %c0_18 = arith.constant 0 : index
    %c0_19 = arith.constant 0 : index
    %22 = vector.load %arg5[%c1_17, %c0_18, %c0_19] : memref<4x1x128xf32, #tpu.memory_space<vmem>>, vector<1x1x128xf32>
    %23 = vector.shape_cast %22 : vector<1x1x128xf32> to vector<1x128xf32>
    %24 = vector.broadcast %23 : vector<1x128xf32> to vector<16x128xf32>
    %25 = arith.addf %21, %24 : vector<16x128xf32>
    %cst_20 = arith.constant 0.000000e+00 : f32
    %26 = vector.broadcast %cst_20 : f32 to vector<16x128xf32>
    %27 = arith.maximumf %25, %26 : vector<16x128xf32>
    %28 = arith.truncf %27 : vector<16x128xf32> to vector<16x128xbf16>
    %c2 = arith.constant 2 : index
    %c0_21 = arith.constant 0 : index
    %c0_22 = arith.constant 0 : index
    %29 = vector.load %arg4[%c2, %c0_21, %c0_22] : memref<4x128x128xbf16, #tpu.memory_space<vmem>>, vector<1x128x128xbf16>
    %30 = vector.shape_cast %29 : vector<1x128x128xbf16> to vector<128x128xbf16>
    %cst_23 = arith.constant dense<0.000000e+00> : vector<16x128xf32>
    %31 = tpu.matmul %28, %30, %cst_23 {dimension_numbers = #tpu.dot_dimension_numbers<[1], [0], [0], [1], [0, 0, 1, 1], [], []>} : vector<16x128xbf16>, vector<128x128xbf16>, vector<16x128xf32> -> vector<16x128xf32>
    %c2_24 = arith.constant 2 : index
    %c0_25 = arith.constant 0 : index
    %c0_26 = arith.constant 0 : index
    %32 = vector.load %arg5[%c2_24, %c0_25, %c0_26] : memref<4x1x128xf32, #tpu.memory_space<vmem>>, vector<1x1x128xf32>
    %33 = vector.shape_cast %32 : vector<1x1x128xf32> to vector<1x128xf32>
    %34 = vector.broadcast %33 : vector<1x128xf32> to vector<16x128xf32>
    %35 = arith.addf %31, %34 : vector<16x128xf32>
    %cst_27 = arith.constant 0.000000e+00 : f32
    %36 = vector.broadcast %cst_27 : f32 to vector<16x128xf32>
    %37 = arith.maximumf %35, %36 : vector<16x128xf32>
    %38 = arith.truncf %37 : vector<16x128xf32> to vector<16x128xbf16>
    %c3 = arith.constant 3 : index
    %c0_28 = arith.constant 0 : index
    %c0_29 = arith.constant 0 : index
    %39 = vector.load %arg4[%c3, %c0_28, %c0_29] : memref<4x128x128xbf16, #tpu.memory_space<vmem>>, vector<1x128x128xbf16>
    %40 = vector.shape_cast %39 : vector<1x128x128xbf16> to vector<128x128xbf16>
    %cst_30 = arith.constant dense<0.000000e+00> : vector<16x128xf32>
    %41 = tpu.matmul %38, %40, %cst_30 {dimension_numbers = #tpu.dot_dimension_numbers<[1], [0], [0], [1], [0, 0, 1, 1], [], []>} : vector<16x128xbf16>, vector<128x128xbf16>, vector<16x128xf32> -> vector<16x128xf32>
    %c3_31 = arith.constant 3 : index
    %c0_32 = arith.constant 0 : index
    %c0_33 = arith.constant 0 : index
    %42 = vector.load %arg5[%c3_31, %c0_32, %c0_33] : memref<4x1x128xf32, #tpu.memory_space<vmem>>, vector<1x1x128xf32>
    %43 = vector.shape_cast %42 : vector<1x1x128xf32> to vector<1x128xf32>
    %44 = vector.broadcast %43 : vector<1x128xf32> to vector<16x128xf32>
    %45 = arith.addf %41, %44 : vector<16x128xf32>
    %cst_34 = arith.constant 0.000000e+00 : f32
    %46 = vector.broadcast %cst_34 : f32 to vector<16x128xf32>
    %47 = arith.maximumf %45, %46 : vector<16x128xf32>
    %48 = arith.truncf %47 : vector<16x128xf32> to vector<16x128xbf16>
    %c0_35 = arith.constant 0 : index
    %c0_36 = arith.constant 0 : index
    %49 = vector.load %arg6[%c0_35, %c0_36] : memref<128x128xbf16, #tpu.memory_space<vmem>>, vector<128x128xbf16>
    %cst_37 = arith.constant dense<0.000000e+00> : vector<16x128xf32>
    %50 = tpu.matmul %48, %49, %cst_37 {dimension_numbers = #tpu.dot_dimension_numbers<[1], [0], [0], [1], [0, 0, 1, 1], [], []>} : vector<16x128xbf16>, vector<128x128xbf16>, vector<16x128xf32> -> vector<16x128xf32>
    %c0_38 = arith.constant 0 : index
    %c0_39 = arith.constant 0 : index
    %51 = vector.load %arg7[%c0_38, %c0_39] : memref<1x128xf32, #tpu.memory_space<vmem>>, vector<1x128xf32>
    %52 = vector.broadcast %51 : vector<1x128xf32> to vector<16x128xf32>
    %53 = arith.addf %50, %52 : vector<16x128xf32>
    %c0_40 = arith.constant 0 : index
    %c0_41 = arith.constant 0 : index
    %54 = vector.load %arg8[%c0_40, %c0_41] : memref<16x128xf32, #tpu.memory_space<vmem>>, vector<16x128xf32>
    tpu.vector_store %arg8[%c0_40, %c0_41], %53 {strides = array<i32>} : memref<16x128xf32, #tpu.memory_space<vmem>>, vector<16x128xf32>,
    return
  }
  func.func @transform_0(%arg0: i32) -> (i32, i32) {
    %c0_i32 = arith.constant 0 : i32
    %c0_i32_0 = arith.constant 0 : i32
    return %arg0, %c0_i32 : i32, i32
  }
  func.func @transform_1(%arg0: i32) -> (i32, i32) {
    %c0_i32 = arith.constant 0 : i32
    %c0_i32_0 = arith.constant 0 : i32
    %c0_i32_1 = arith.constant 0 : i32
    return %c0_i32, %c0_i32_0 : i32, i32
  }
  func.func @transform_2(%arg0: i32) -> (i32, i32) {
    %c0_i32 = arith.constant 0 : i32
    %c0_i32_0 = arith.constant 0 : i32
    %c0_i32_1 = arith.constant 0 : i32
    return %c0_i32, %c0_i32_0 : i32, i32
  }
  func.func @transform_3(%arg0: i32) -> (i32, i32, i32) {
    %c0_i32 = arith.constant 0 : i32
    %c0_i32_0 = arith.constant 0 : i32
    %c0_i32_1 = arith.constant 0 : i32
    %c0_i32_2 = arith.constant 0 : i32
    return %c0_i32, %c0_i32_0, %c0_i32_1 : i32, i32, i32
  }
  func.func @transform_4(%arg0: i32) -> (i32, i32, i32) {
    %c0_i32 = arith.constant 0 : i32
    %c0_i32_0 = arith.constant 0 : i32
    %c0_i32_1 = arith.constant 0 : i32
    %c0_i32_2 = arith.constant 0 : i32
    return %c0_i32, %c0_i32_0, %c0_i32_1 : i32, i32, i32
  }
  func.func @transform_5(%arg0: i32) -> (i32, i32) {
    %c0_i32 = arith.constant 0 : i32
    %c0_i32_0 = arith.constant 0 : i32
    %c0_i32_1 = arith.constant 0 : i32
    return %c0_i32, %c0_i32_0 : i32, i32
  }
  func.func @transform_6(%arg0: i32) -> (i32, i32) {
    %c0_i32 = arith.constant 0 : i32
    %c0_i32_0 = arith.constant 0 : i32
    %c0_i32_1 = arith.constant 0 : i32
    return %c0_i32, %c0_i32_0 : i32, i32
  }
  func.func @transform_7(%arg0: i32) -> (i32, i32) {
    %c0_i32 = arith.constant 0 : i32
    %c0_i32_0 = arith.constant 0 : i32
    return %arg0, %c0_i32 : i32, i32
  }
}

</mosaic_0001>

<llo_original>
// kernel: tpu_custom_call.1
$region0: #{tpu_custom_call.1}
  #allocation0 [shape = 'u32[]', space=smem, size = 0x4, offset = 0x4, fixed_abs, tag = 'smem constant byte address 0x4 - core index']
  #allocation1 [shape = 'u32[144,128]{1,0:T(1,128)}', space=vmem, size = 0x12000, scoped, tag = 'internal scratch']
  %s0 = inlined_call_operand.hbm [shape: f32[8,128], index: 0, kind: input, shape index: {}]
  %s1 = inlined_call_operand.hbm [shape: f32[8,128], index: 1, kind: input, shape index: {}]
  %s2 = inlined_call_operand.hbm [shape: f32[8,128], index: 2, kind: output, shape index: {}]
  %s3 = sld [smem:[#allocation0]]
  $region26: #{tpu_custom_call.1} parent=0
    _
  %s5 = ssub.s32 1, %s3
  %s6 = scalar_select 0, %s5, %s3
  $region1: #{tpu_custom_call.1} parent=0
    #allocation2 [shape = 'u8[4096]{0}', space=vmem, size = 0x1000, scoped, tag = 'input window, operand 0, single buffered']
    #allocation3 [shape = 's32[1]{0}', space=sflag, size = 0x4, scoped, tag = 'scoped memory for tpu_custom_call.1']
    #allocation4 [shape = 's32[1]{0}', space=sflag, size = 0x4, scoped, tag = 'scoped memory for tpu_custom_call.1']
    #allocation5 [shape = 'u8[4096]{0}', space=vmem, size = 0x1000, scoped, tag = 'input window, operand 1, single buffered']
    #allocation6 [shape = 's32[1]{0}', space=sflag, size = 0x4, scoped, tag = 'scoped memory for tpu_custom_call.1']
    #allocation7 [shape = 'u8[4096]{0}', space=vmem, size = 0x1000, scoped, tag = 'output window, operand 0, single buffered']
    %7 = vsyncpa [#allocation3], 0
    %8 = vsyncpa [#allocation6], 0
    %9 = vsyncpa [#allocation4], 0
    // Predicated region
    $region2: #{tpu_custom_call.1} parent=1 // pred_check
      _
    $region3: #{tpu_custom_call.1} parent=1 // pred_check_branch
      %11 = sbr.rel (0) target = $region5
    $region4: #{tpu_custom_call.1} parent=1 // pred_region
      %s13 = ssub.s32 128, 128
      %14 = vsyncadd [#allocation3], %s13
      %s16 = sshll.u32 [#allocation2], 4
      %s17 = int_to_ptr.vmem [resolvable:$true] %s16
      %19 = dma.hbm_to_vmem [thread:$0]  %s0, 128, %s17, [#allocation3]
    $region5: #{tpu_custom_call.1} parent=1 // pred_fallthru
      _
    // Predicated region
    $region6: #{tpu_custom_call.1} parent=1 // pred_check
      _
    $region7: #{tpu_custom_call.1} parent=1 // pred_check_branch
      %21 = sbr.rel (0) target = $region9
    $region8: #{tpu_custom_call.1} parent=1 // pred_region
      %s23 = ssub.s32 128, 128
      %24 = vsyncadd [#allocation6], %s23
      %s26 = sshll.u32 [#allocation5], 4
      %s27 = int_to_ptr.vmem [resolvable:$true] %s26
      %29 = dma.hbm_to_vmem [thread:$0]  %s1, 128, %s27, [#allocation6]
    $region9: #{tpu_custom_call.1} parent=1 // pred_fallthru
      _
    // Predicated region
    $region10: #{tpu_custom_call.1} parent=1 // pred_check
      _
    $region11: #{tpu_custom_call.1} parent=1 // pred_check_branch
      %31 = sbr.rel (0) target = $region13
    $region12: #{tpu_custom_call.1} parent=1 // pred_region
      %32 = dma.done [#allocation3], 128
    $region13: #{tpu_custom_call.1} parent=1 // pred_fallthru
      _
    // Predicated region
    $region14: #{tpu_custom_call.1} parent=1 // pred_check
      _
    $region15: #{tpu_custom_call.1} parent=1 // pred_check_branch
      %34 = sbr.rel (0) target = $region17
    $region16: #{tpu_custom_call.1} parent=1 // pred_region
      %35 = dma.done [#allocation6], 128
    $region17: #{tpu_custom_call.1} parent=1 // pred_fallthru
      _
    %v36 = vld [vmem:[#allocation2] sm:$0xff]
    %v37 = vld [vmem:[#allocation5] sm:$0xff]
    %v38 = vadd.f32 %v36, %v37
    %39 = vst [vmem:[#allocation7] sm:$0xff] %v38
    // Predicated region
    $region18: #{tpu_custom_call.1} parent=1 // pred_check
      _
    $region19: #{tpu_custom_call.1} parent=1 // pred_check_branch
      %41 = sbr.rel (0) target = $region21
    $region20: #{tpu_custom_call.1} parent=1 // pred_region
      %s43 = ssub.s32 128, 128
      %44 = vsyncadd [#allocation4], %s43
      %s46 = sshll.u32 [#allocation7], 4
      %s47 = int_to_ptr.vmem [resolvable:$true] %s46
      %49 = dma.vmem_to_hbm [thread:$0]  %s47, 128, %s2, [#allocation4]
    $region21: #{tpu_custom_call.1} parent=1 // pred_fallthru
      _
    // Predicated region
    $region22: #{tpu_custom_call.1} parent=1 // pred_check
      _
    $region23: #{tpu_custom_call.1} parent=1 // pred_check_branch
      %51 = sbr.rel (0) target = $region25
    $region24: #{tpu_custom_call.1} parent=1 // pred_region
      %52 = dma.done [#allocation4], 128
    $region25: #{tpu_custom_call.1} parent=1 // pred_fallthru
      _
    %53 = vsyncpa [#allocation3], 1
    %54 = vsyncpa [#allocation6], 1
    %55 = vsyncpa [#allocation4], 1

// kernel: dynamics_network_forward.1
$region0: #{dynamics_network_forward.1}
  #allocation0 [shape = 'u32[]', space=smem, size = 0x4, offset = 0x4, fixed_abs, tag = 'smem constant byte address 0x4 - core index']
  #allocation1 [shape = 'u32[144,128]{1,0:T(1,128)}', space=vmem, size = 0x12000, scoped, tag = 'internal scratch']
  %s0 = inlined_call_operand.vmem [shape: bf16[16,128], index: 0, kind: input, shape index: {}]
  %s1 = inlined_call_operand.hbm [shape: bf16[128,128], index: 1, kind: input, shape index: {}]
  %s2 = inlined_call_operand.vmem [shape: f32[1,128], index: 2, kind: input, shape index: {}]
  %s3 = inlined_call_operand.hbm [shape: bf16[4,128,128], index: 3, kind: input, shape index: {}]
  %s4 = inlined_call_operand.vmem [shape: f32[4,1,128], index: 4, kind: input, shape index: {}]
  %s5 = inlined_call_operand.hbm [shape: bf16[128,128], index: 5, kind: input, shape index: {}]
  %s6 = inlined_call_operand.vmem [shape: f32[1,128], index: 6, kind: input, shape index: {}]
  %s7 = inlined_call_operand.vmem [shape: f32[16,128], index: 7, kind: output, shape index: {}]
  %s8 = sld [smem:[#allocation0]]
  $region50: #{dynamics_network_forward.1} parent=0
    _
  %s10 = ssub.s32 1, %s8
  %s11 = scalar_select 0, %s10, %s8
  $region1: #{dynamics_network_forward.1} parent=0
    #allocation2 [shape = 'u8[32768]{0}', space=vmem, size = 0x8000, scoped, tag = 'input window, operand 1, single buffered']
    #allocation3 [shape = 's32[1]{0}', space=sflag, size = 0x4, scoped, tag = 'scoped memory for dynamics_network_forward.1']
    #allocation4 [shape = 'u8[131072]{0}', space=vmem, size = 0x20000, scoped, tag = 'input window, operand 3, single buffered']
    #allocation5 [shape = 's32[1]{0}', space=sflag, size = 0x4, scoped, tag = 'scoped memory for dynamics_network_forward.1']
    #allocation6 [shape = 'u8[32768]{0}', space=vmem, size = 0x8000, scoped, tag = 'input window, operand 5, single buffered']
    %12 = vsyncpa [#allocation3], 0
    %13 = vsyncpa [#allocation5], 0
    // Predicated region
    $region2: #{dynamics_network_forward.1} parent=1 // pred_check
      _
    $region3: #{dynamics_network_forward.1} parent=1 // pred_check_branch
      %15 = sbr.rel (0) target = $region5
    $region4: #{dynamics_network_forward.1} parent=1 // pred_region
      _
    $region5: #{dynamics_network_forward.1} parent=1 // pred_fallthru
      _
    // Predicated region
    $region6: #{dynamics_network_forward.1} parent=1 // pred_check
      _
    $region7: #{dynamics_network_forward.1} parent=1 // pred_check_branch
      %17 = sbr.rel (0) target = $region9
    $region8: #{dynamics_network_forward.1} parent=1 // pred_region
      %s19 = ssub.s32 1024, 1024
      %20 = vsyncadd [#allocation3], %s19
      %s21 = sshll.u32 [#allocation2], 4
      %s22 = int_to_ptr.vmem [resolvable:$true] %s21
      %27 = dma.hbm_to_vmem [thread:$0]  %s1, 1024, %s22, [#allocation3], 64, 64, 4
    $region9: #{dynamics_network_forward.1} parent=1 // pred_fallthru
      _
    // Predicated region
    $region10: #{dynamics_network_forward.1} parent=1 // pred_check
      _
    $region11: #{dynamics_network_forward.1} parent=1 // pred_check_branch
      %29 = sbr.rel (0) target = $region13
    $region12: #{dynamics_network_forward.1} parent=1 // pred_region
      _
    $region13: #{dynamics_network_forward.1} parent=1 // pred_fallthru
      _
    // Predicated region
    $region14: #{dynamics_network_forward.1} parent=1 // pred_check
      _
    $region15: #{dynamics_network_forward.1} parent=1 // pred_check_branch
      %31 = sbr.rel (0) target = $region17
    $region16: #{dynamics_network_forward.1} parent=1 // pred_region
      %s33 = ssub.s32 4096, 4096
      %34 = vsyncadd [#allocation5], %s33
      %s35 = sshll.u32 [#allocation4], 4
      %s36 = int_to_ptr.vmem [resolvable:$true] %s35
      %41 = dma.hbm_to_vmem [thread:$0]  %s3, 4096, %s36, [#allocation5], 64, 64, 4
    $region17: #{dynamics_network_forward.1} parent=1 // pred_fallthru
      _
    // Predicated region
    $region18: #{dynamics_network_forward.1} parent=1 // pred_check
      _
    $region19: #{dynamics_network_forward.1} parent=1 // pred_check_branch
      %43 = sbr.rel (0) target = $region21
    $region20: #{dynamics_network_forward.1} parent=1 // pred_region
      _
    $region21: #{dynamics_network_forward.1} parent=1 // pred_fallthru
      _
    // Predicated region
    $region22: #{dynamics_network_forward.1} parent=1 // pred_check
      _
    $region23: #{dynamics_network_forward.1} parent=1 // pred_check_branch
      %45 = sbr.rel (0) target = $region25
    $region24: #{dynamics_network_forward.1} parent=1 // pred_region
      %s47 = ssub.s32 1024, 1024
      %48 = vsyncadd [#allocation5], %s47
      %s49 = sshll.u32 [#allocation6], 4
      %s50 = int_to_ptr.vmem [resolvable:$true] %s49
      %55 = dma.hbm_to_vmem [thread:$0]  %s5, 1024, %s50, [#allocation5], 64, 64, 4
    $region25: #{dynamics_network_forward.1} parent=1 // pred_fallthru
      _
    // Predicated region
    $region26: #{dynamics_network_forward.1} parent=1 // pred_check
      _
    $region27: #{dynamics_network_forward.1} parent=1 // pred_check_branch
      %57 = sbr.rel (0) target = $region29
    $region28: #{dynamics_network_forward.1} parent=1 // pred_region
      _
    $region29: #{dynamics_network_forward.1} parent=1 // pred_fallthru
      _
    // Predicated region
    $region30: #{dynamics_network_forward.1} parent=1 // pred_check
      _
    $region31: #{dynamics_network_forward.1} parent=1 // pred_check_branch
      %59 = sbr.rel (0) target = $region33
    $region32: #{dynamics_network_forward.1} parent=1 // pred_region
      %60 = dma.done [#allocation3], 1024
    $region33: #{dynamics_network_forward.1} parent=1 // pred_fallthru
      _
    // Predicated region
    $region34: #{dynamics_network_forward.1} parent=1 // pred_check
      _
    $region35: #{dynamics_network_forward.1} parent=1 // pred_check_branch
      %62 = sbr.rel (0) target = $region37
    $region36: #{dynamics_network_forward.1} parent=1 // pred_region
      %63 = dma.done [#allocation5], 4096
    $region37: #{dynamics_network_forward.1} parent=1 // pred_fallthru
      _
    // Predicated region
    $region38: #{dynamics_network_forward.1} parent=1 // pred_check
      _
    $region39: #{dynamics_network_forward.1} parent=1 // pred_check_branch
      %65 = sbr.rel (0) target = $region41
    $region40: #{dynamics_network_forward.1} parent=1 // pred_region
      %66 = dma.done [#allocation5], 1024
    $region41: #{dynamics_network_forward.1} parent=1 // pred_fallthru
      _
    %v68 = vld [vmem:[%s0] sm:$0xf]
    %v69 = vld [vmem:[%s0 + $0x4] sm:$0xf]
    %v70 = vld [vmem:[#allocation2] sm:$0xf]
    %v71 = vld [vmem:[#allocation2 + $0x4] sm:$0xf]
    %v72 = vld [vmem:[#allocation2 + $0x8] sm:$0xf]
    %v73 = vld [vmem:[#allocation2 + $0xc] sm:$0xf]
    %v74 = vld [vmem:[#allocation2 + $0x10] sm:$0xf]
    %v75 = vld [vmem:[#allocation2 + $0x14] sm:$0xf]
    %v76 = vld [vmem:[#allocation2 + $0x18] sm:$0xf]
    %v77 = vld [vmem:[#allocation2 + $0x1c] sm:$0xf]
    %v78 = vld [vmem:[#allocation2 + $0x20] sm:$0xf]
    %v79 = vld [vmem:[#allocation2 + $0x24] sm:$0xf]
    %v80 = vld [vmem:[#allocation2 + $0x28] sm:$0xf]
    %v81 = vld [vmem:[#allocation2 + $0x2c] sm:$0xf]
    %v82 = vld [vmem:[#allocation2 + $0x30] sm:$0xf]
    %v83 = vld [vmem:[#allocation2 + $0x34] sm:$0xf]
    %v84 = vld [vmem:[#allocation2 + $0x38] sm:$0xf]
    %v85 = vld [vmem:[#allocation2 + $0x3c] sm:$0xf]
    %v86 = vld [vmem:[%s2] sm:$0x1]
    %v88 = vlaneseq
    %v89 = vshrl.u32 %v88, 7
    %v90 = vsub.s32 0, %v89
    %v91 = vrot.slane %v86, %v90
    %v95 = vunpack.c.l.b16 %v68
    %v96 = vunpack.c.l.b16 %v69
    %v97 = vpack.c.b16 %v96, %v95
    %v115 = vunpack.c.l.b16 %v70
    %v116 = vunpack.c.l.b16 %v71
    %v117 = vunpack.c.l.b16 %v72
    %v118 = vunpack.c.l.b16 %v73
    %v119 = vunpack.c.l.b16 %v74
    %v120 = vunpack.c.l.b16 %v75
    %v121 = vunpack.c.l.b16 %v76
    %v122 = vunpack.c.l.b16 %v77
    %v123 = vunpack.c.l.b16 %v78
    %v124 = vunpack.c.l.b16 %v79
    %v125 = vunpack.c.l.b16 %v80
    %v126 = vunpack.c.l.b16 %v81
    %v127 = vunpack.c.l.b16 %v82
    %v128 = vunpack.c.l.b16 %v83
    %v129 = vunpack.c.l.b16 %v84
    %v130 = vunpack.c.l.b16 %v85
    %v131 = vpack.c.b16 %v116, %v115
    %v132 = vpack.c.b16 %v118, %v117
    %v133 = vpack.c.b16 %v120, %v119
    %v134 = vpack.c.b16 %v122, %v121
    %v135 = vpack.c.b16 %v124, %v123
    %v136 = vpack.c.b16 %v126, %v125
    %v137 = vpack.c.b16 %v128, %v127
    %v138 = vpack.c.b16 %v130, %v129
    %147 = vmatprep.subr.bf16.mxu0 0
    %148 = vmatpush1.bf16.msra.mxu0 %v138
    %149 = vmatprep.subr.bf16.mxu0 0
    %150 = vmatpush1.bf16.msra.mxu0 %v137
    %151 = vmatprep.subr.bf16.mxu0 0
    %152 = vmatpush1.bf16.msra.mxu0 %v136
    %153 = vmatprep.subr.bf16.mxu0 0
    %154 = vmatpush1.bf16.msra.mxu0 %v135
    %155 = vmatprep.subr.bf16.mxu0 0
    %156 = vmatpush1.bf16.msra.mxu0 %v134
    %157 = vmatprep.subr.bf16.mxu0 0
    %158 = vmatpush1.bf16.msra.mxu0 %v133
    %159 = vmatprep.subr.bf16.mxu0 0
    %160 = vmatpush1.bf16.msra.mxu0 %v132
    %161 = vmatprep.subr.bf16.mxu0 0
    %162 = vmatpush1.bf16.msra.mxu0 %v131
    %163 = vmatprep.subr.bf16.mxu0 0
    %164 = vmatpush2.bf16.msra.mxu0 0
    %165 = vmatprep.subr.bf16.mxu0 0
    %166 = vmatpush2.bf16.msra.mxu0 0
    %167 = vmatprep.subr.bf16.mxu0 0
    %168 = vmatpush2.bf16.msra.mxu0 0
    %169 = vmatprep.subr.bf16.mxu0 0
    %170 = vmatpush2.bf16.msra.mxu0 0
    %171 = vmatprep.subr.bf16.mxu0 0
    %172 = vmatpush2.bf16.msra.mxu0 0
    %173 = vmatprep.subr.bf16.mxu0 0
    %174 = vmatpush2.bf16.msra.mxu0 0
    %175 = vmatprep.subr.bf16.mxu0 0
    %176 = vmatpush2.bf16.msra.mxu0 0
    %177 = vmatprep.subr.bf16.mxu0 0
    %178 = vmatpush2.bf16.msra.mxu0 0
    %179 = vmatprep.mubr.bf16.mxu0 0
    %180 = vmatmul.mubr.bf16.gmra.mxu0 %v97
    %v181 = vpop.f32.mrf.mxu0
    %v182 = vadd.f32 %v91, %v181
    %v183 = vpop.f32.mrf.mxu0
    %v184 = vpop.f32.mrf.mxu0
    %v185 = vadd.f32 %v91, %v184
    %v186 = vpop.f32.mrf.mxu0
    %187 = vdwg.mxu0
    %v188 = vmax.f32 %v182, 0.0
    %v189 = vmax.f32 %v185, 0.0
    %v190 = vpack.c.bf16 %v189, %v188
    %v191 = vld [vmem:[#allocation4] sm:$0xf]
    %v192 = vld [vmem:[#allocation4 + $0x4] sm:$0xf]
    %v193 = vld [vmem:[#allocation4 + $0x8] sm:$0xf]
    %v194 = vld [vmem:[#allocation4 + $0xc] sm:$0xf]
    %v195 = vld [vmem:[#allocation4 + $0x10] sm:$0xf]
    %v196 = vld [vmem:[#allocation4 + $0x14] sm:$0xf]
    %v197 = vld [vmem:[#allocation4 + $0x18] sm:$0xf]
    %v198 = vld [vmem:[#allocation4 + $0x1c] sm:$0xf]
    %v199 = vld [vmem:[#allocation4 + $0x20] sm:$0xf]
    %v200 = vld [vmem:[#allocation4 + $0x24] sm:$0xf]
    %v201 = vld [vmem:[#allocation4 + $0x28] sm:$0xf]
    %v202 = vld [vmem:[#allocation4 + $0x2c] sm:$0xf]
    %v203 = vld [vmem:[#allocation4 + $0x30] sm:$0xf]
    %v204 = vld [vmem:[#allocation4 + $0x34] sm:$0xf]
    %v205 = vld [vmem:[#allocation4 + $0x38] sm:$0xf]
    %v206 = vld [vmem:[#allocation4 + $0x3c] sm:$0xf]
    %v207 = vld [vmem:[%s4] sm:$0x1]
    %v209 = vlaneseq
    %v210 = vshrl.u32 %v209, 7
    %v211 = vsub.s32 0, %v210
    %v212 = vrot.slane %v207, %v211
    %v230 = vunpack.c.l.b16 %v191
    %v231 = vunpack.c.l.b16 %v192
    %v232 = vunpack.c.l.b16 %v193
    %v233 = vunpack.c.l.b16 %v194
    %v234 = vunpack.c.l.b16 %v195
    %v235 = vunpack.c.l.b16 %v196
    %v236 = vunpack.c.l.b16 %v197
    %v237 = vunpack.c.l.b16 %v198
    %v238 = vunpack.c.l.b16 %v199
    %v239 = vunpack.c.l.b16 %v200
    %v240 = vunpack.c.l.b16 %v201
    %v241 = vunpack.c.l.b16 %v202
    %v242 = vunpack.c.l.b16 %v203
    %v243 = vunpack.c.l.b16 %v204
    %v244 = vunpack.c.l.b16 %v205
    %v245 = vunpack.c.l.b16 %v206
    %v246 = vpack.c.b16 %v231, %v230
    %v247 = vpack.c.b16 %v233, %v232
    %v248 = vpack.c.b16 %v235, %v234
    %v249 = vpack.c.b16 %v237, %v236
    %v250 = vpack.c.b16 %v239, %v238
    %v251 = vpack.c.b16 %v241, %v240
    %v252 = vpack.c.b16 %v243, %v242
    %v253 = vpack.c.b16 %v245, %v244
    %262 = vmatprep.subr.bf16.mxu0 0
    %263 = vmatpush1.bf16.msra.mxu0 %v253
    %264 = vmatprep.subr.bf16.mxu0 0
    %265 = vmatpush1.bf16.msra.mxu0 %v252
    %266 = vmatprep.subr.bf16.mxu0 0
    %267 = vmatpush1.bf16.msra.mxu0 %v251
    %268 = vmatprep.subr.bf16.mxu0 0
    %269 = vmatpush1.bf16.msra.mxu0 %v250
    %270 = vmatprep.subr.bf16.mxu0 0
    %271 = vmatpush1.bf16.msra.mxu0 %v249
    %272 = vmatprep.subr.bf16.mxu0 0
    %273 = vmatpush1.bf16.msra.mxu0 %v248
    %274 = vmatprep.subr.bf16.mxu0 0
    %275 = vmatpush1.bf16.msra.mxu0 %v247
    %276 = vmatprep.subr.bf16.mxu0 0
    %277 = vmatpush1.bf16.msra.mxu0 %v246
    %278 = vmatprep.subr.bf16.mxu0 0
    %279 = vmatpush2.bf16.msra.mxu0 0
    %280 = vmatprep.subr.bf16.mxu0 0
    %281 = vmatpush2.bf16.msra.mxu0 0
    %282 = vmatprep.subr.bf16.mxu0 0
    %283 = vmatpush2.bf16.msra.mxu0 0
    %284 = vmatprep.subr.bf16.mxu0 0
    %285 = vmatpush2.bf16.msra.mxu0 0
    %286 = vmatprep.subr.bf16.mxu0 0
    %287 = vmatpush2.bf16.msra.mxu0 0
    %288 = vmatprep.subr.bf16.mxu0 0
    %289 = vmatpush2.bf16.msra.mxu0 0
    %290 = vmatprep.subr.bf16.mxu0 0
    %291 = vmatpush2.bf16.msra.mxu0 0
    %292 = vmatprep.subr.bf16.mxu0 0
    %293 = vmatpush2.bf16.msra.mxu0 0
    %294 = vmatprep.mubr.bf16.mxu0 0
    %295 = vmatmul.mubr.bf16.gmra.mxu0 %v190
    %v296 = vpop.f32.mrf.mxu0
    %v297 = vadd.f32 %v212, %v296
    %v298 = vpop.f32.mrf.mxu0
    %v299 = vpop.f32.mrf.mxu0
    %v300 = vadd.f32 %v212, %v299
    %v301 = vpop.f32.mrf.mxu0
    %302 = vdwg.mxu0
    %v303 = vmax.f32 %v297, 0.0
    %v304 = vmax.f32 %v300, 0.0
    %v305 = vpack.c.bf16 %v304, %v303
    %s306 = scalar_lea.vmem [#allocation4], 64
    %v307 = vld [vmem:[%s306] sm:$0xf]
    %v308 = vld [vmem:[%s306 + $0x4] sm:$0xf]
    %v309 = vld [vmem:[%s306 + $0x8] sm:$0xf]
    %v310 = vld [vmem:[%s306 + $0xc] sm:$0xf]
    %v311 = vld [vmem:[%s306 + $0x10] sm:$0xf]
    %v312 = vld [vmem:[%s306 + $0x14] sm:$0xf]
    %v313 = vld [vmem:[%s306 + $0x18] sm:$0xf]
    %v314 = vld [vmem:[%s306 + $0x1c] sm:$0xf]
    %v315 = vld [vmem:[%s306 + $0x20] sm:$0xf]
    %v316 = vld [vmem:[%s306 + $0x24] sm:$0xf]
    %v317 = vld [vmem:[%s306 + $0x28] sm:$0xf]
    %v318 = vld [vmem:[%s306 + $0x2c] sm:$0xf]
    %v319 = vld [vmem:[%s306 + $0x30] sm:$0xf]
    %v320 = vld [vmem:[%s306 + $0x34] sm:$0xf]
    %v321 = vld [vmem:[%s306 + $0x38] sm:$0xf]
    %v322 = vld [vmem:[%s306 + $0x3c] sm:$0xf]
    %s323 = scalar_lea.vmem %s4, 1
    %v324 = vld [vmem:[%s323] sm:$0x1]
    %v326 = vlaneseq
    %v327 = vshrl.u32 %v326, 7
    %v328 = vsub.s32 0, %v327
    %v329 = vrot.slane %v324, %v328
    %v347 = vunpack.c.l.b16 %v307
    %v348 = vunpack.c.l.b16 %v308
    %v349 = vunpack.c.l.b16 %v309
    %v350 = vunpack.c.l.b16 %v310
    %v351 = vunpack.c.l.b16 %v311
    %v352 = vunpack.c.l.b16 %v312
    %v353 = vunpack.c.l.b16 %v313
    %v354 = vunpack.c.l.b16 %v314
    %v355 = vunpack.c.l.b16 %v315
    %v356 = vunpack.c.l.b16 %v316
    %v357 = vunpack.c.l.b16 %v317
    %v358 = vunpack.c.l.b16 %v318
    %v359 = vunpack.c.l.b16 %v319
    %v360 = vunpack.c.l.b16 %v320
    %v361 = vunpack.c.l.b16 %v321
    %v362 = vunpack.c.l.b16 %v322
    %v363 = vpack.c.b16 %v348, %v347
    %v364 = vpack.c.b16 %v350, %v349
    %v365 = vpack.c.b16 %v352, %v351
    %v366 = vpack.c.b16 %v354, %v353
    %v367 = vpack.c.b16 %v356, %v355
    %v368 = vpack.c.b16 %v358, %v357
    %v369 = vpack.c.b16 %v360, %v359
    %v370 = vpack.c.b16 %v362, %v361
    %379 = vmatprep.subr.bf16.mxu0 0
    %380 = vmatpush1.bf16.msra.mxu0 %v370
    %381 = vmatprep.subr.bf16.mxu0 0
    %382 = vmatpush1.bf16.msra.mxu0 %v369
    %383 = vmatprep.subr.bf16.mxu0 0
    %384 = vmatpush1.bf16.msra.mxu0 %v368
    %385 = vmatprep.subr.bf16.mxu0 0
    %386 = vmatpush1.bf16.msra.mxu0 %v367
    %387 = vmatprep.subr.bf16.mxu0 0
    %388 = vmatpush1.bf16.msra.mxu0 %v366
    %389 = vmatprep.subr.bf16.mxu0 0
    %390 = vmatpush1.bf16.msra.mxu0 %v365
    %391 = vmatprep.subr.bf16.mxu0 0
    %392 = vmatpush1.bf16.msra.mxu0 %v364
    %393 = vmatprep.subr.bf16.mxu0 0
    %394 = vmatpush1.bf16.msra.mxu0 %v363
    %395 = vmatprep.subr.bf16.mxu0 0
    %396 = vmatpush2.bf16.msra.mxu0 0
    %397 = vmatprep.subr.bf16.mxu0 0
    %398 = vmatpush2.bf16.msra.mxu0 0
    %399 = vmatprep.subr.bf16.mxu0 0
    %400 = vmatpush2.bf16.msra.mxu0 0
    %401 = vmatprep.subr.bf16.mxu0 0
    %402 = vmatpush2.bf16.msra.mxu0 0
    %403 = vmatprep.subr.bf16.mxu0 0
    %404 = vmatpush2.bf16.msra.mxu0 0
    %405 = vmatprep.subr.bf16.mxu0 0
    %406 = vmatpush2.bf16.msra.mxu0 0
    %407 = vmatprep.subr.bf16.mxu0 0
    %408 = vmatpush2.bf16.msra.mxu0 0
    %409 = vmatprep.subr.bf16.mxu0 0
    %410 = vmatpush2.bf16.msra.mxu0 0
    %411 = vmatprep.mubr.bf16.mxu0 0
    %412 = vmatmul.mubr.bf16.gmra.mxu0 %v305
    %v413 = vpop.f32.mrf.mxu0
    %v414 = vadd.f32 %v329, %v413
    %v415 = vpop.f32.mrf.mxu0
    %v416 = vpop.f32.mrf.mxu0
    %v417 = vadd.f32 %v329, %v416
    %v418 = vpop.f32.mrf.mxu0
    %419 = vdwg.mxu0
    %v420 = vmax.f32 %v414, 0.0
    %v421 = vmax.f32 %v417, 0.0
    %v422 = vpack.c.bf16 %v421, %v420
    %s423 = scalar_lea.vmem [#allocation4], 128
    %v424 = vld [vmem:[%s423] sm:$0xf]
    %v425 = vld [vmem:[%s423 + $0x4] sm:$0xf]
    %v426 = vld [vmem:[%s423 + $0x8] sm:$0xf]
    %v427 = vld [vmem:[%s423 + $0xc] sm:$0xf]
    %v428 = vld [vmem:[%s423 + $0x10] sm:$0xf]
    %v429 = vld [vmem:[%s423 + $0x14] sm:$0xf]
    %v430 = vld [vmem:[%s423 + $0x18] sm:$0xf]
    %v431 = vld [vmem:[%s423 + $0x1c] sm:$0xf]
    %v432 = vld [vmem:[%s423 + $0x20] sm:$0xf]
    %v433 = vld [vmem:[%s423 + $0x24] sm:$0xf]
    %v434 = vld [vmem:[%s423 + $0x28] sm:$0xf]
    %v435 = vld [vmem:[%s423 + $0x2c] sm:$0xf]
    %v436 = vld [vmem:[%s423 + $0x30] sm:$0xf]
    %v437 = vld [vmem:[%s423 + $0x34] sm:$0xf]
    %v438 = vld [vmem:[%s423 + $0x38] sm:$0xf]
    %v439 = vld [vmem:[%s423 + $0x3c] sm:$0xf]
    %s440 = scalar_lea.vmem %s4, 2
    %v441 = vld [vmem:[%s440] sm:$0x1]
    %v443 = vlaneseq
    %v444 = vshrl.u32 %v443, 7
    %v445 = vsub.s32 0, %v444
    %v446 = vrot.slane %v441, %v445
    %v464 = vunpack.c.l.b16 %v424
    %v465 = vunpack.c.l.b16 %v425
    %v466 = vunpack.c.l.b16 %v426
    %v467 = vunpack.c.l.b16 %v427
    %v468 = vunpack.c.l.b16 %v428
    %v469 = vunpack.c.l.b16 %v429
    %v470 = vunpack.c.l.b16 %v430
    %v471 = vunpack.c.l.b16 %v431
    %v472 = vunpack.c.l.b16 %v432
    %v473 = vunpack.c.l.b16 %v433
    %v474 = vunpack.c.l.b16 %v434
    %v475 = vunpack.c.l.b16 %v435
    %v476 = vunpack.c.l.b16 %v436
    %v477 = vunpack.c.l.b16 %v437
    %v478 = vunpack.c.l.b16 %v438
    %v479 = vunpack.c.l.b16 %v439
    %v480 = vpack.c.b16 %v465, %v464
    %v481 = vpack.c.b16 %v467, %v466
    %v482 = vpack.c.b16 %v469, %v468
    %v483 = vpack.c.b16 %v471, %v470
    %v484 = vpack.c.b16 %v473, %v472
    %v485 = vpack.c.b16 %v475, %v474
    %v486 = vpack.c.b16 %v477, %v476
    %v487 = vpack.c.b16 %v479, %v478
    %496 = vmatprep.subr.bf16.mxu0 0
    %497 = vmatpush1.bf16.msra.mxu0 %v487
    %498 = vmatprep.subr.bf16.mxu0 0
    %499 = vmatpush1.bf16.msra.mxu0 %v486
    %500 = vmatprep.subr.bf16.mxu0 0
    %501 = vmatpush1.bf16.msra.mxu0 %v485
    %502 = vmatprep.subr.bf16.mxu0 0
    %503 = vmatpush1.bf16.msra.mxu0 %v484
    %504 = vmatprep.subr.bf16.mxu0 0
    %505 = vmatpush1.bf16.msra.mxu0 %v483
    %506 = vmatprep.subr.bf16.mxu0 0
    %507 = vmatpush1.bf16.msra.mxu0 %v482
    %508 = vmatprep.subr.bf16.mxu0 0
    %509 = vmatpush1.bf16.msra.mxu0 %v481
    %510 = vmatprep.subr.bf16.mxu0 0
    %511 = vmatpush1.bf16.msra.mxu0 %v480
    %512 = vmatprep.subr.bf16.mxu0 0
    %513 = vmatpush2.bf16.msra.mxu0 0
    %514 = vmatprep.subr.bf16.mxu0 0
    %515 = vmatpush2.bf16.msra.mxu0 0
    %516 = vmatprep.subr.bf16.mxu0 0
    %517 = vmatpush2.bf16.msra.mxu0 0
    %518 = vmatprep.subr.bf16.mxu0 0
    %519 = vmatpush2.bf16.msra.mxu0 0
    %520 = vmatprep.subr.bf16.mxu0 0
    %521 = vmatpush2.bf16.msra.mxu0 0
    %522 = vmatprep.subr.bf16.mxu0 0
    %523 = vmatpush2.bf16.msra.mxu0 0
    %524 = vmatprep.subr.bf16.mxu0 0
    %525 = vmatpush2.bf16.msra.mxu0 0
    %526 = vmatprep.subr.bf16.mxu0 0
    %527 = vmatpush2.bf16.msra.mxu0 0
    %528 = vmatprep.mubr.bf16.mxu0 0
    %529 = vmatmul.mubr.bf16.gmra.mxu0 %v422
    %v530 = vpop.f32.mrf.mxu0
    %v531 = vadd.f32 %v446, %v530
    %v532 = vpop.f32.mrf.mxu0
    %v533 = vpop.f32.mrf.mxu0
    %v534 = vadd.f32 %v446, %v533
    %v535 = vpop.f32.mrf.mxu0
    %536 = vdwg.mxu0
    %v537 = vmax.f32 %v531, 0.0
    %v538 = vmax.f32 %v534, 0.0
    %v539 = vpack.c.bf16 %v538, %v537
    %s540 = scalar_lea.vmem [#allocation4], 192
    %v541 = vld [vmem:[%s540] sm:$0xf]
    %v542 = vld [vmem:[%s540 + $0x4] sm:$0xf]
    %v543 = vld [vmem:[%s540 + $0x8] sm:$0xf]
    %v544 = vld [vmem:[%s540 + $0xc] sm:$0xf]
    %v545 = vld [vmem:[%s540 + $0x10] sm:$0xf]
    %v546 = vld [vmem:[%s540 + $0x14] sm:$0xf]
    %v547 = vld [vmem:[%s540 + $0x18] sm:$0xf]
    %v548 = vld [vmem:[%s540 + $0x1c] sm:$0xf]
    %v549 = vld [vmem:[%s540 + $0x20] sm:$0xf]
    %v550 = vld [vmem:[%s540 + $0x24] sm:$0xf]
    %v551 = vld [vmem:[%s540 + $0x28] sm:$0xf]
    %v552 = vld [vmem:[%s540 + $0x2c] sm:$0xf]
    %v553 = vld [vmem:[%s540 + $0x30] sm:$0xf]
    %v554 = vld [vmem:[%s540 + $0x34] sm:$0xf]
    %v555 = vld [vmem:[%s540 + $0x38] sm:$0xf]
    %v556 = vld [vmem:[%s540 + $0x3c] sm:$0xf]
    %s557 = scalar_lea.vmem %s4, 3
    %v558 = vld [vmem:[%s557] sm:$0x1]
    %v560 = vlaneseq
    %v561 = vshrl.u32 %v560, 7
    %v562 = vsub.s32 0, %v561
    %v563 = vrot.slane %v558, %v562
    %v581 = vunpack.c.l.b16 %v541
    %v582 = vunpack.c.l.b16 %v542
    %v583 = vunpack.c.l.b16 %v543
    %v584 = vunpack.c.l.b16 %v544
    %v585 = vunpack.c.l.b16 %v545
    %v586 = vunpack.c.l.b16 %v546
    %v587 = vunpack.c.l.b16 %v547
    %v588 = vunpack.c.l.b16 %v548
    %v589 = vunpack.c.l.b16 %v549
    %v590 = vunpack.c.l.b16 %v550
    %v591 = vunpack.c.l.b16 %v551
    %v592 = vunpack.c.l.b16 %v552
    %v593 = vunpack.c.l.b16 %v553
    %v594 = vunpack.c.l.b16 %v554
    %v595 = vunpack.c.l.b16 %v555
    %v596 = vunpack.c.l.b16 %v556
    %v597 = vpack.c.b16 %v582, %v581
    %v598 = vpack.c.b16 %v584, %v583
    %v599 = vpack.c.b16 %v586, %v585
    %v600 = vpack.c.b16 %v588, %v587
    %v601 = vpack.c.b16 %v590, %v589
    %v602 = vpack.c.b16 %v592, %v591
    %v603 = vpack.c.b16 %v594, %v593
    %v604 = vpack.c.b16 %v596, %v595
    %613 = vmatprep.subr.bf16.mxu0 0
    %614 = vmatpush1.bf16.msra.mxu0 %v604
    %615 = vmatprep.subr.bf16.mxu0 0
    %616 = vmatpush1.bf16.msra.mxu0 %v603
    %617 = vmatprep.subr.bf16.mxu0 0
    %618 = vmatpush1.bf16.msra.mxu0 %v602
    %619 = vmatprep.subr.bf16.mxu0 0
    %620 = vmatpush1.bf16.msra.mxu0 %v601
    %621 = vmatprep.subr.bf16.mxu0 0
    %622 = vmatpush1.bf16.msra.mxu0 %v600
    %623 = vmatprep.subr.bf16.mxu0 0
    %624 = vmatpush1.bf16.msra.mxu0 %v599
    %625 = vmatprep.subr.bf16.mxu0 0
    %626 = vmatpush1.bf16.msra.mxu0 %v598
    %627 = vmatprep.subr.bf16.mxu0 0
    %628 = vmatpush1.bf16.msra.mxu0 %v597
    %629 = vmatprep.subr.bf16.mxu0 0
    %630 = vmatpush2.bf16.msra.mxu0 0
    %631 = vmatprep.subr.bf16.mxu0 0
    %632 = vmatpush2.bf16.msra.mxu0 0
    %633 = vmatprep.subr.bf16.mxu0 0
    %634 = vmatpush2.bf16.msra.mxu0 0
    %635 = vmatprep.subr.bf16.mxu0 0
    %636 = vmatpush2.bf16.msra.mxu0 0
    %637 = vmatprep.subr.bf16.mxu0 0
    %638 = vmatpush2.bf16.msra.mxu0 0
    %639 = vmatprep.subr.bf16.mxu0 0
    %640 = vmatpush2.bf16.msra.mxu0 0
    %641 = vmatprep.subr.bf16.mxu0 0
    %642 = vmatpush2.bf16.msra.mxu0 0
    %643 = vmatprep.subr.bf16.mxu0 0
    %644 = vmatpush2.bf16.msra.mxu0 0
    %645 = vmatprep.mubr.bf16.mxu0 0
    %646 = vmatmul.mubr.bf16.gmra.mxu0 %v539
    %v647 = vpop.f32.mrf.mxu0
    %v648 = vadd.f32 %v563, %v647
    %v649 = vpop.f32.mrf.mxu0
    %v650 = vpop.f32.mrf.mxu0
    %v651 = vadd.f32 %v563, %v650
    %v652 = vpop.f32.mrf.mxu0
    %653 = vdwg.mxu0
    %v654 = vmax.f32 %v648, 0.0
    %v655 = vmax.f32 %v651, 0.0
    %v656 = vpack.c.bf16 %v655, %v654
    %v657 = vld [vmem:[#allocation6] sm:$0xf]
    %v658 = vld [vmem:[#allocation6 + $0x4] sm:$0xf]
    %v659 = vld [vmem:[#allocation6 + $0x8] sm:$0xf]
    %v660 = vld [vmem:[#allocation6 + $0xc] sm:$0xf]
    %v661 = vld [vmem:[#allocation6 + $0x10] sm:$0xf]
    %v662 = vld [vmem:[#allocation6 + $0x14] sm:$0xf]
    %v663 = vld [vmem:[#allocation6 + $0x18] sm:$0xf]
    %v664 = vld [vmem:[#allocation6 + $0x1c] sm:$0xf]
    %v665 = vld [vmem:[#allocation6 + $0x20] sm:$0xf]
    %v666 = vld [vmem:[#allocation6 + $0x24] sm:$0xf]
    %v667 = vld [vmem:[#allocation6 + $0x28] sm:$0xf]
    %v668 = vld [vmem:[#allocation6 + $0x2c] sm:$0xf]
    %v669 = vld [vmem:[#allocation6 + $0x30] sm:$0xf]
    %v670 = vld [vmem:[#allocation6 + $0x34] sm:$0xf]
    %v671 = vld [vmem:[#allocation6 + $0x38] sm:$0xf]
    %v672 = vld [vmem:[#allocation6 + $0x3c] sm:$0xf]
    %v673 = vld [vmem:[%s6] sm:$0x1]
    %v675 = vlaneseq
    %v676 = vshrl.u32 %v675, 7
    %v677 = vsub.s32 0, %v676
    %v678 = vrot.slane %v673, %v677
    %v696 = vunpack.c.l.b16 %v657
    %v697 = vunpack.c.l.b16 %v658
    %v698 = vunpack.c.l.b16 %v659
    %v699 = vunpack.c.l.b16 %v660
    %v700 = vunpack.c.l.b16 %v661
    %v701 = vunpack.c.l.b16 %v662
    %v702 = vunpack.c.l.b16 %v663
    %v703 = vunpack.c.l.b16 %v664
    %v704 = vunpack.c.l.b16 %v665
    %v705 = vunpack.c.l.b16 %v666
    %v706 = vunpack.c.l.b16 %v667
    %v707 = vunpack.c.l.b16 %v668
    %v708 = vunpack.c.l.b16 %v669
    %v709 = vunpack.c.l.b16 %v670
    %v710 = vunpack.c.l.b16 %v671
    %v711 = vunpack.c.l.b16 %v672
    %v712 = vpack.c.b16 %v697, %v696
    %v713 = vpack.c.b16 %v699, %v698
    %v714 = vpack.c.b16 %v701, %v700
    %v715 = vpack.c.b16 %v703, %v702
    %v716 = vpack.c.b16 %v705, %v704
    %v717 = vpack.c.b16 %v707, %v706
    %v718 = vpack.c.b16 %v709, %v708
    %v719 = vpack.c.b16 %v711, %v710
    %728 = vmatprep.subr.bf16.mxu0 0
    %729 = vmatpush1.bf16.msra.mxu0 %v719
    %730 = vmatprep.subr.bf16.mxu0 0
    %731 = vmatpush1.bf16.msra.mxu0 %v718
    %732 = vmatprep.subr.bf16.mxu0 0
    %733 = vmatpush1.bf16.msra.mxu0 %v717
    %734 = vmatprep.subr.bf16.mxu0 0
    %735 = vmatpush1.bf16.msra.mxu0 %v716
    %736 = vmatprep.subr.bf16.mxu0 0
    %737 = vmatpush1.bf16.msra.mxu0 %v715
    %738 = vmatprep.subr.bf16.mxu0 0
    %739 = vmatpush1.bf16.msra.mxu0 %v714
    %740 = vmatprep.subr.bf16.mxu0 0
    %741 = vmatpush1.bf16.msra.mxu0 %v713
    %742 = vmatprep.subr.bf16.mxu0 0
    %743 = vmatpush1.bf16.msra.mxu0 %v712
    %744 = vmatprep.subr.bf16.mxu0 0
    %745 = vmatpush2.bf16.msra.mxu0 0
    %746 = vmatprep.subr.bf16.mxu0 0
    %747 = vmatpush2.bf16.msra.mxu0 0
    %748 = vmatprep.subr.bf16.mxu0 0
    %749 = vmatpush2.bf16.msra.mxu0 0
    %750 = vmatprep.subr.bf16.mxu0 0
    %751 = vmatpush2.bf16.msra.mxu0 0
    %752 = vmatprep.subr.bf16.mxu0 0
    %753 = vmatpush2.bf16.msra.mxu0 0
    %754 = vmatprep.subr.bf16.mxu0 0
    %755 = vmatpush2.bf16.msra.mxu0 0
    %756 = vmatprep.subr.bf16.mxu0 0
    %757 = vmatpush2.bf16.msra.mxu0 0
    %758 = vmatprep.subr.bf16.mxu0 0
    %759 = vmatpush2.bf16.msra.mxu0 0
    %760 = vmatprep.mubr.bf16.mxu0 0
    %761 = vmatmul.mubr.bf16.gmra.mxu0 %v656
    %v762 = vpop.f32.mrf.mxu0
    %v763 = vadd.f32 %v678, %v762
    %v764 = vpop.f32.mrf.mxu0
    %v765 = vpop.f32.mrf.mxu0
    %v766 = vadd.f32 %v678, %v765
    %v767 = vpop.f32.mrf.mxu0
    %768 = vdwg.mxu0
    %769 = vst [vmem:[%s7] sm:$0xff] %v763
    %770 = vst [vmem:[%s7 + $0x8] sm:$0xff] %v766
    // Predicated region
    $region42: #{dynamics_network_forward.1} parent=1 // pred_check
      _
    $region43: #{dynamics_network_forward.1} parent=1 // pred_check_branch
      %772 = sbr.rel (0) target = $region45
    $region44: #{dynamics_network_forward.1} parent=1 // pred_region
      _
    $region45: #{dynamics_network_forward.1} parent=1 // pred_fallthru
      _
    // Predicated region
    $region46: #{dynamics_network_forward.1} parent=1 // pred_check
      _
    $region47: #{dynamics_network_forward.1} parent=1 // pred_check_branch
      %774 = sbr.rel (0) target = $region49
    $region48: #{dynamics_network_forward.1} parent=1 // pred_region
      _
    $region49: #{dynamics_network_forward.1} parent=1 // pred_fallthru
      _
    %775 = vsyncpa [#allocation3], 1
    %776 = vsyncpa [#allocation5], 1

</llo_original>
